<compile_context>
chip_gen: v6e
topology: v6e:2x2x1
jax: 0.10.0
libtpu: 0.0.40
codegen_flags: <defaults>
</compile_context>

<pallas_src>
import functools

import numpy as np
import jax
import jax.numpy as jnp
from jax.experimental import pallas as pl
from jax.experimental.pallas import tpu as pltpu

_LANE = 128
_SUBLANE = 8


def _ceil_to(v, m):
    return ((v + m - 1) // m) * m


def _pad_axis(a, target, axis):
    pad = target - a.shape[axis]
    if pad <= 0:
        return a
    widths = [(0, 0)] * a.ndim
    widths[axis] = (0, pad)
    return jnp.pad(a, widths)


# ----------------------------- Pallas kernel ------------------------------ #
def _netae_kernel(x_ref, wb_ref, bb_ref,           # replicated base weights
                  we_ref, be_ref,                  # block-diagonal experts
                  wv_ref, bv_ref,                  # block-diagonal attention_v
                  wk_ref, bk_ref,                  # block-diagonal attention_k
                  q_ref,                           # tiled task query (1, n*DK_p)
                  repsum_ref, fold_ref,            # constant selector matrices
                  wt_ref, bt_ref, wl_ref, bl_ref,  # tower + last
                  o_ref):
    f32 = jnp.float32
    x = x_ref[...]                                                     # (B, IN)
    # base, replicated n times along lanes: h_cat = [h, h, ..., h]
    h = jax.nn.relu(jnp.dot(x, wb_ref[...], preferred_element_type=f32)
                    + bb_ref[...])                                     # (B, n*H_p)
    # all experts at once via block-diagonal weights
    e = jax.nn.relu(jnp.dot(h, we_ref[...], preferred_element_type=f32)
                    + be_ref[...])                                     # (B, n*H_p)
    v = jnp.dot(e, wv_ref[...], preferred_element_type=f32) + bv_ref[...]  # [v_0..v_{n-1}]
    k = jnp.dot(e, wk_ref[...], preferred_element_type=f32) + bk_ref[...]  # [k_0..k_{n-1}]
    # expkq_i = k_i . q  for every expert, broadcast back onto each expert's
    # DV-lane group via the constant selector `repsum` (raw weights, no norm).
    kq = k * q_ref[...]
    expkq_rep = jnp.dot(kq, repsum_ref[...], preferred_element_type=f32)   # (B, n*DV_p)
    # res = sum_i expkq_i * v_i   (fold the n expert lane-groups onto DV lanes)
    res = jnp.dot(expkq_rep * v, fold_ref[...], preferred_element_type=f32)  # (B, DV_p)
    t = jax.nn.relu(jnp.dot(res, wt_ref[...], preferred_element_type=f32)
                    + bt_ref[...])                                     # (B, T_p)
    o_ref[...] = jnp.dot(t, wl_ref[...], preferred_element_type=f32) + bl_ref[...]


# --------------------------- parameter packing ----------------------------- #
def pack_params(p):
    """Pack raw per-expert params into lane-padded block-diagonal matrices."""
    n, H, _ = p["we"].shape
    IN = p["wb"].shape[0]
    DV = p["wv"].shape[2]
    DK = p["wk"].shape[2]
    T = p["wt"].shape[1]
    OUT = p["wl"].shape[1]

    nH, nDK, nDV = n * H, n * DK, n * DV
    nH_p, nDK_p, nDV_p = (_ceil_to(v, _LANE) for v in (nH, nDK, nDV))
    DV_p, T_p, OUT_p = (_ceil_to(v, _LANE) for v in (DV, T, OUT))

    def block_diag(w, r, c, r_p, c_p):
        bd = np.zeros((r_p, c_p), np.float32)
        w = np.asarray(w, np.float32)
        for i in range(n):
            bd[i * r:(i + 1) * r, i * c:(i + 1) * c] = w[i]
        return jnp.asarray(bd)

    # per-expert lane-group sum selector: (n*DK_p, n*DV_p)
    jj = np.arange(nDK_p)
    mm = np.arange(nDV_p)
    repsum = ((jj[:, None] // DK) == (mm[None, :] // DV)) \
        & (jj[:, None] < nDK) & (mm[None, :] < nDV)
    # expert-fold selector: (n*DV_p, DV_p)
    dd = np.arange(DV_p)
    fold = ((mm[:, None] % DV) == dd[None, :]) \
        & (mm[:, None] < nDV) & (dd[None, :] < DV)

    return {
        "wb": _pad_axis(jnp.tile(p["wb"], (1, n)), nH_p, 1),
        "bb": _pad_axis(jnp.tile(p["bb"], (1, n)), nH_p, 1),
        "we": block_diag(p["we"], H, H, nH_p, nH_p),
        "be": _pad_axis(p["be"][:, 0, :].reshape(1, nH), nH_p, 1),
        "wv": block_diag(p["wv"], H, DV, nH_p, nDV_p),
        "bv": _pad_axis(p["bv"][:, 0, :].reshape(1, nDV), nDV_p, 1),
        "wk": block_diag(p["wk"], H, DK, nH_p, nDK_p),
        "bk": _pad_axis(p["bk"][:, 0, :].reshape(1, nDK), nDK_p, 1),
        "repsum": jnp.asarray(repsum, jnp.float32),
        "fold": jnp.asarray(fold, jnp.float32),
        "wt": _pad_axis(_pad_axis(p["wt"], T_p, 1), DV_p, 0),
        "bt": _pad_axis(p["bt"], T_p, 1),
        "wl": _pad_axis(_pad_axis(p["wl"], OUT_p, 1), T_p, 0),
        "bl": _pad_axis(p["bl"], OUT_p, 1),
        "wq": p["wq"], "bq": p["bq"],
        "meta": dict(n=n, IN=IN, H=H, DK=DK, DV=DV, OUT=OUT,
                     nDK_p=nDK_p, OUT_p=OUT_p),
    }


# ------------------------------ wrapper ----------------------------------- #
def netae_forward(packed, x, task_id):
    """x: (B, IN) f32; task_id: static python int. Returns (B, OUT) f32."""
    m = packed["meta"]
    n, OUT = m["n"], m["OUT"]
    nDK_p, OUT_p = m["nDK_p"], m["OUT_p"]

    B = x.shape[0]
    Bp = _ceil_to(max(B, 1), _SUBLANE)
    x_p = _pad_axis(x.astype(jnp.float32), Bp, 0)

    # q-net applied to one-hot(task_id) == row `task_id` of wq[task_id] + bias.
    q = packed["wq"][task_id, task_id, :] + packed["bq"][task_id, 0, :]     # (DK,)
    q_tiled = _pad_axis(jnp.tile(q, n)[None, :], nDK_p, 1)                  # (1, n*DK_p)

    args = (x_p,
            packed["wb"], packed["bb"],
            packed["we"], packed["be"],
            packed["wv"], packed["bv"],
            packed["wk"], packed["bk"],
            q_tiled,
            packed["repsum"], packed["fold"],
            packed["wt"], packed["bt"], packed["wl"], packed["bl"])

    def _full(a):
        nd = a.ndim
        return pl.BlockSpec(a.shape, lambda i, _nd=nd: (0,) * _nd)

    out = pl.pallas_call(
        _netae_kernel,
        out_shape=jax.ShapeDtypeStruct((Bp, OUT_p), jnp.float32),
        grid=(1,),
        in_specs=[_full(a) for a in args],
        out_specs=pl.BlockSpec((Bp, OUT_p), lambda i: (0, 0)),
        compiler_params=pltpu.CompilerParams(
            dimension_semantics=("arbitrary",)),
    )(*args)
    return out[:B, :OUT]


# --------------------- deterministic parameter init ------------------------ #
def init_params(key, *, in_dim, hidden, d_k, d_v, n_experts, task_nums,
                tower_dim, output_shape):
    ks = jax.random.split(key, 16)
    s = 0.1
    f32 = jnp.float32
    return {
        "wb": s * jax.random.normal(ks[0], (in_dim, hidden), f32),
        "bb": s * jax.random.normal(ks[1], (1, hidden), f32),
        "we": s * jax.random.normal(ks[2], (n_experts, hidden, hidden), f32),
        "be": s * jax.random.normal(ks[3], (n_experts, 1, hidden), f32),
        "wv": s * jax.random.normal(ks[4], (n_experts, hidden, d_v), f32),
        "bv": s * jax.random.normal(ks[5], (n_experts, 1, d_v), f32),
        "wk": s * jax.random.normal(ks[6], (n_experts, hidden, d_k), f32),
        "bk": s * jax.random.normal(ks[7], (n_experts, 1, d_k), f32),
        "wq": s * jax.random.normal(ks[8], (task_nums, task_nums, d_k), f32),
        "bq": s * jax.random.normal(ks[9], (task_nums, 1, d_k), f32),
        "wt": s * jax.random.normal(ks[10], (d_v, tower_dim), f32),
        "bt": s * jax.random.normal(ks[11], (1, tower_dim), f32),
        "wl": 1e-3 * jax.random.normal(ks[12], (tower_dim, output_shape), f32),
        "bl": jnp.zeros((1, output_shape), f32),
    }


# --------------------------- pure-JAX reference ---------------------------- #
def netae_reference(params, x, task_id):
    p = params
    q = p["wq"][task_id, task_id] + p["bq"][task_id, 0]                     # (DK,)
    h = jax.nn.relu(x @ p["wb"] + p["bb"])
    res = jnp.zeros((x.shape[0], p["wv"].shape[2]), jnp.float32)
    for i in range(p["we"].shape[0]):
        e = jax.nn.relu(h @ p["we"][i] + p["be"][i])
        v = e @ p["wv"][i] + p["bv"][i]
        k = e @ p["wk"][i] + p["bk"][i]
        res = res + (k @ q)[:, None] * v        # raw expkq weights (torch semantics)
    t = jax.nn.relu(res @ p["wt"] + p["bt"])
    return t @ p["wl"] + p["bl"]


# ---------------------------------- main ----------------------------------- #
if __name__ == "__main__":
    IN, H, DK, DV = 32, 32, 32, 32
    N_EXPERTS, TASK_NUMS = 4, 8
    TOWER, OUT = 32, 16

    key = jax.random.PRNGKey(0)
    kx, kp = jax.random.split(key)
    params = init_params(kp, in_dim=IN, hidden=H, d_k=DK, d_v=DV,
                         n_experts=N_EXPERTS, task_nums=TASK_NUMS,
                         tower_dim=TOWER, output_shape=OUT)
    packed = pack_params(params)

    x = jax.random.normal(kx, (1, IN), jnp.float32)
    task_id = 3

    fwd = jax.jit(functools.partial(netae_forward, packed), static_argnums=1)
    y = fwd(x, task_id)
    jax.block_until_ready(y)

    y_ref = netae_reference(params, x, task_id)
    assert y.shape == (1, OUT)
    assert jnp.allclose(y, y_ref, atol=1e-4, rtol=1e-4), (y, y_ref)

    # edge case: n_experts == 1 still works after the vectorized restructuring
    params1 = init_params(kp, in_dim=IN, hidden=H, d_k=DK, d_v=DV,
                          n_experts=1, task_nums=TASK_NUMS,
                          tower_dim=TOWER, output_shape=OUT)
    packed1 = pack_params(params1)
    y1 = jax.jit(functools.partial(netae_forward, packed1), static_argnums=1)(x, 2)
    jax.block_until_ready(y1)
    y1_ref = netae_reference(params1, x, 2)
    assert jnp.allclose(y1, y1_ref, atol=1e-4, rtol=1e-4), (y1, y1_ref)

    print("KERNEL_OK")
</pallas_src>

<mosaic_0001>
module attributes {stable_mosaic.version = 11 : i64} {
  func.func @_netae_kernel(%arg0: i32, %arg1: memref<8x32xf32, #tpu.memory_space<vmem>>, %arg2: memref<32x128xf32, #tpu.memory_space<vmem>>, %arg3: memref<1x128xf32, #tpu.memory_space<vmem>>, %arg4: memref<128x128xf32, #tpu.memory_space<vmem>>, %arg5: memref<1x128xf32, #tpu.memory_space<vmem>>, %arg6: memref<128x128xf32, #tpu.memory_space<vmem>>, %arg7: memref<1x128xf32, #tpu.memory_space<vmem>>, %arg8: memref<128x128xf32, #tpu.memory_space<vmem>>, %arg9: memref<1x128xf32, #tpu.memory_space<vmem>>, %arg10: memref<1x128xf32, #tpu.memory_space<vmem>>, %arg11: memref<128x128xf32, #tpu.memory_space<vmem>>, %arg12: memref<128x128xf32, #tpu.memory_space<vmem>>, %arg13: memref<128x128xf32, #tpu.memory_space<vmem>>, %arg14: memref<1x128xf32, #tpu.memory_space<vmem>>, %arg15: memref<128x128xf32, #tpu.memory_space<vmem>>, %arg16: memref<1x128xf32, #tpu.memory_space<vmem>>, %arg17: memref<8x128xf32, #tpu.memory_space<vmem>>) attributes {dimension_semantics = [#tpu.dimension_semantics<arbitrary>], iteration_bounds = array<i64: 1>, scalar_prefetch = 0 : i64, scratch_operands = 0 : i64, tpu.core_type = #tpu.core_type<tc>, window_params = [{pipeline_mode = #tpu.pipeline_mode<synchronous>, transform_indices = @transform_0, window_bounds = array<i64: 8, 32>}, {pipeline_mode = #tpu.pipeline_mode<synchronous>, transform_indices = @transform_1, window_bounds = array<i64: 32, 128>}, {pipeline_mode = #tpu.pipeline_mode<synchronous>, transform_indices = @transform_2, window_bounds = array<i64: 1, 128>}, {pipeline_mode = #tpu.pipeline_mode<synchronous>, transform_indices = @transform_3, window_bounds = array<i64: 128, 128>}, {pipeline_mode = #tpu.pipeline_mode<synchronous>, transform_indices = @transform_4, window_bounds = array<i64: 1, 128>}, {pipeline_mode = #tpu.pipeline_mode<synchronous>, transform_indices = @transform_5, window_bounds = array<i64: 128, 128>}, {pipeline_mode = #tpu.pipeline_mode<synchronous>, transform_indices = @transform_6, window_bounds = array<i64: 1, 128>}, {pipeline_mode = #tpu.pipeline_mode<synchronous>, transform_indices = @transform_7, window_bounds = array<i64: 128, 128>}, {pipeline_mode = #tpu.pipeline_mode<synchronous>, transform_indices = @transform_8, window_bounds = array<i64: 1, 128>}, {pipeline_mode = #tpu.pipeline_mode<synchronous>, transform_indices = @transform_9, window_bounds = array<i64: 1, 128>}, {pipeline_mode = #tpu.pipeline_mode<synchronous>, transform_indices = @transform_10, window_bounds = array<i64: 128, 128>}, {pipeline_mode = #tpu.pipeline_mode<synchronous>, transform_indices = @transform_11, window_bounds = array<i64: 128, 128>}, {pipeline_mode = #tpu.pipeline_mode<synchronous>, transform_indices = @transform_12, window_bounds = array<i64: 128, 128>}, {pipeline_mode = #tpu.pipeline_mode<synchronous>, transform_indices = @transform_13, window_bounds = array<i64: 1, 128>}, {pipeline_mode = #tpu.pipeline_mode<synchronous>, transform_indices = @transform_14, window_bounds = array<i64: 128, 128>}, {pipeline_mode = #tpu.pipeline_mode<synchronous>, transform_indices = @transform_15, window_bounds = array<i64: 1, 128>}, {pipeline_mode = #tpu.pipeline_mode<synchronous>, transform_indices = @transform_16, window_bounds = array<i64: 8, 128>}]} {
    %c0 = arith.constant 0 : index
    %c0_0 = arith.constant 0 : index
    %0 = vector.load %arg1[%c0, %c0_0] : memref<8x32xf32, #tpu.memory_space<vmem>>, vector<8x32xf32>
    %c0_1 = arith.constant 0 : index
    %c0_2 = arith.constant 0 : index
    %1 = vector.load %arg2[%c0_1, %c0_2] : memref<32x128xf32, #tpu.memory_space<vmem>>, vector<32x128xf32>
    %cst = arith.constant dense<0.000000e+00> : vector<8x128xf32>
    %2 = tpu.matmul %0, %1, %cst {dimension_numbers = #tpu.dot_dimension_numbers<[1], [0], [0], [1], [0, 0, 1, 1], [], []>} : vector<8x32xf32>, vector<32x128xf32>, vector<8x128xf32> -> vector<8x128xf32>
    %c0_3 = arith.constant 0 : index
    %c0_4 = arith.constant 0 : index
    %3 = vector.load %arg3[%c0_3, %c0_4] : memref<1x128xf32, #tpu.memory_space<vmem>>, vector<1x128xf32>
    %4 = vector.broadcast %3 : vector<1x128xf32> to vector<8x128xf32>
    %5 = arith.addf %2, %4 : vector<8x128xf32>
    %cst_5 = arith.constant 0.000000e+00 : f32
    %6 = vector.broadcast %cst_5 : f32 to vector<8x128xf32>
    %7 = arith.maximumf %5, %6 : vector<8x128xf32>
    %c0_6 = arith.constant 0 : index
    %c0_7 = arith.constant 0 : index
    %8 = vector.load %arg4[%c0_6, %c0_7] : memref<128x128xf32, #tpu.memory_space<vmem>>, vector<128x128xf32>
    %cst_8 = arith.constant dense<0.000000e+00> : vector<8x128xf32>
    %9 = tpu.matmul %7, %8, %cst_8 {dimension_numbers = #tpu.dot_dimension_numbers<[1], [0], [0], [1], [0, 0, 1, 1], [], []>} : vector<8x128xf32>, vector<128x128xf32>, vector<8x128xf32> -> vector<8x128xf32>
    %c0_9 = arith.constant 0 : index
    %c0_10 = arith.constant 0 : index
    %10 = vector.load %arg5[%c0_9, %c0_10] : memref<1x128xf32, #tpu.memory_space<vmem>>, vector<1x128xf32>
    %11 = vector.broadcast %10 : vector<1x128xf32> to vector<8x128xf32>
    %12 = arith.addf %9, %11 : vector<8x128xf32>
    %cst_11 = arith.constant 0.000000e+00 : f32
    %13 = vector.broadcast %cst_11 : f32 to vector<8x128xf32>
    %14 = arith.maximumf %12, %13 : vector<8x128xf32>
    %c0_12 = arith.constant 0 : index
    %c0_13 = arith.constant 0 : index
    %15 = vector.load %arg6[%c0_12, %c0_13] : memref<128x128xf32, #tpu.memory_space<vmem>>, vector<128x128xf32>
    %cst_14 = arith.constant dense<0.000000e+00> : vector<8x128xf32>
    %16 = tpu.matmul %14, %15, %cst_14 {dimension_numbers = #tpu.dot_dimension_numbers<[1], [0], [0], [1], [0, 0, 1, 1], [], []>} : vector<8x128xf32>, vector<128x128xf32>, vector<8x128xf32> -> vector<8x128xf32>
    %c0_15 = arith.constant 0 : index
    %c0_16 = arith.constant 0 : index
    %17 = vector.load %arg7[%c0_15, %c0_16] : memref<1x128xf32, #tpu.memory_space<vmem>>, vector<1x128xf32>
    %18 = vector.broadcast %17 : vector<1x128xf32> to vector<8x128xf32>
    %19 = arith.addf %16, %18 : vector<8x128xf32>
    %c0_17 = arith.constant 0 : index
    %c0_18 = arith.constant 0 : index
    %20 = vector.load %arg8[%c0_17, %c0_18] : memref<128x128xf32, #tpu.memory_space<vmem>>, vector<128x128xf32>
    %cst_19 = arith.constant dense<0.000000e+00> : vector<8x128xf32>
    %21 = tpu.matmul %14, %20, %cst_19 {dimension_numbers = #tpu.dot_dimension_numbers<[1], [0], [0], [1], [0, 0, 1, 1], [], []>} : vector<8x128xf32>, vector<128x128xf32>, vector<8x128xf32> -> vector<8x128xf32>
    %c0_20 = arith.constant 0 : index
    %c0_21 = arith.constant 0 : index
    %22 = vector.load %arg9[%c0_20, %c0_21] : memref<1x128xf32, #tpu.memory_space<vmem>>, vector<1x128xf32>
    %23 = vector.broadcast %22 : vector<1x128xf32> to vector<8x128xf32>
    %24 = arith.addf %21, %23 : vector<8x128xf32>
    %c0_22 = arith.constant 0 : index
    %c0_23 = arith.constant 0 : index
    %25 = vector.load %arg10[%c0_22, %c0_23] : memref<1x128xf32, #tpu.memory_space<vmem>>, vector<1x128xf32>
    %26 = vector.broadcast %25 : vector<1x128xf32> to vector<8x128xf32>
    %27 = arith.mulf %24, %26 : vector<8x128xf32>
    %c0_24 = arith.constant 0 : index
    %c0_25 = arith.constant 0 : index
    %28 = vector.load %arg11[%c0_24, %c0_25] : memref<128x128xf32, #tpu.memory_space<vmem>>, vector<128x128xf32>
    %cst_26 = arith.constant dense<0.000000e+00> : vector<8x128xf32>
    %29 = tpu.matmul %27, %28, %cst_26 {dimension_numbers = #tpu.dot_dimension_numbers<[1], [0], [0], [1], [0, 0, 1, 1], [], []>} : vector<8x128xf32>, vector<128x128xf32>, vector<8x128xf32> -> vector<8x128xf32>
    %30 = arith.mulf %29, %19 : vector<8x128xf32>
    %c0_27 = arith.constant 0 : index
    %c0_28 = arith.constant 0 : index
    %31 = vector.load %arg12[%c0_27, %c0_28] : memref<128x128xf32, #tpu.memory_space<vmem>>, vector<128x128xf32>
    %cst_29 = arith.constant dense<0.000000e+00> : vector<8x128xf32>
    %32 = tpu.matmul %30, %31, %cst_29 {dimension_numbers = #tpu.dot_dimension_numbers<[1], [0], [0], [1], [0, 0, 1, 1], [], []>} : vector<8x128xf32>, vector<128x128xf32>, vector<8x128xf32> -> vector<8x128xf32>
    %c0_30 = arith.constant 0 : index
    %c0_31 = arith.constant 0 : index
    %33 = vector.load %arg13[%c0_30, %c0_31] : memref<128x128xf32, #tpu.memory_space<vmem>>, vector<128x128xf32>
    %cst_32 = arith.constant dense<0.000000e+00> : vector<8x128xf32>
    %34 = tpu.matmul %32, %33, %cst_32 {dimension_numbers = #tpu.dot_dimension_numbers<[1], [0], [0], [1], [0, 0, 1, 1], [], []>} : vector<8x128xf32>, vector<128x128xf32>, vector<8x128xf32> -> vector<8x128xf32>
    %c0_33 = arith.constant 0 : index
    %c0_34 = arith.constant 0 : index
    %35 = vector.load %arg14[%c0_33, %c0_34] : memref<1x128xf32, #tpu.memory_space<vmem>>, vector<1x128xf32>
    %36 = vector.broadcast %35 : vector<1x128xf32> to vector<8x128xf32>
    %37 = arith.addf %34, %36 : vector<8x128xf32>
    %cst_35 = arith.constant 0.000000e+00 : f32
    %38 = vector.broadcast %cst_35 : f32 to vector<8x128xf32>
    %39 = arith.maximumf %37, %38 : vector<8x128xf32>
    %c0_36 = arith.constant 0 : index
    %c0_37 = arith.constant 0 : index
    %40 = vector.load %arg15[%c0_36, %c0_37] : memref<128x128xf32, #tpu.memory_space<vmem>>, vector<128x128xf32>
    %cst_38 = arith.constant dense<0.000000e+00> : vector<8x128xf32>
    %41 = tpu.matmul %39, %40, %cst_38 {dimension_numbers = #tpu.dot_dimension_numbers<[1], [0], [0], [1], [0, 0, 1, 1], [], []>} : vector<8x128xf32>, vector<128x128xf32>, vector<8x128xf32> -> vector<8x128xf32>
    %c0_39 = arith.constant 0 : index
    %c0_40 = arith.constant 0 : index
    %42 = vector.load %arg16[%c0_39, %c0_40] : memref<1x128xf32, #tpu.memory_space<vmem>>, vector<1x128xf32>
    %43 = vector.broadcast %42 : vector<1x128xf32> to vector<8x128xf32>
    %44 = arith.addf %41, %43 : vector<8x128xf32>
    %c0_41 = arith.constant 0 : index
    %c0_42 = arith.constant 0 : index
    %45 = vector.load %arg17[%c0_41, %c0_42] : memref<8x128xf32, #tpu.memory_space<vmem>>, vector<8x128xf32>
    tpu.vector_store %arg17[%c0_41, %c0_42], %44 {strides = array<i32>} : memref<8x128xf32, #tpu.memory_space<vmem>>, vector<8x128xf32>,
    return
  }
  func.func @transform_0(%arg0: i32) -> (i32, i32) {
    %c0_i32 = arith.constant 0 : i32
    %c0_i32_0 = arith.constant 0 : i32
    %c0_i32_1 = arith.constant 0 : i32
    return %c0_i32, %c0_i32_0 : i32, i32
  }
  func.func @transform_1(%arg0: i32) -> (i32, i32) {
    %c0_i32 = arith.constant 0 : i32
    %c0_i32_0 = arith.constant 0 : i32
    %c0_i32_1 = arith.constant 0 : i32
    return %c0_i32, %c0_i32_0 : i32, i32
  }
  func.func @transform_2(%arg0: i32) -> (i32, i32) {
    %c0_i32 = arith.constant 0 : i32
    %c0_i32_0 = arith.constant 0 : i32
    %c0_i32_1 = arith.constant 0 : i32
    return %c0_i32, %c0_i32_0 : i32, i32
  }
  func.func @transform_3(%arg0: i32) -> (i32, i32) {
    %c0_i32 = arith.constant 0 : i32
    %c0_i32_0 = arith.constant 0 : i32
    %c0_i32_1 = arith.constant 0 : i32
    return %c0_i32, %c0_i32_0 : i32, i32
  }
  func.func @transform_4(%arg0: i32) -> (i32, i32) {
    %c0_i32 = arith.constant 0 : i32
    %c0_i32_0 = arith.constant 0 : i32
    %c0_i32_1 = arith.constant 0 : i32
    return %c0_i32, %c0_i32_0 : i32, i32
  }
  func.func @transform_5(%arg0: i32) -> (i32, i32) {
    %c0_i32 = arith.constant 0 : i32
    %c0_i32_0 = arith.constant 0 : i32
    %c0_i32_1 = arith.constant 0 : i32
    return %c0_i32, %c0_i32_0 : i32, i32
  }
  func.func @transform_6(%arg0: i32) -> (i32, i32) {
    %c0_i32 = arith.constant 0 : i32
    %c0_i32_0 = arith.constant 0 : i32
    %c0_i32_1 = arith.constant 0 : i32
    return %c0_i32, %c0_i32_0 : i32, i32
  }
  func.func @transform_7(%arg0: i32) -> (i32, i32) {
    %c0_i32 = arith.constant 0 : i32
    %c0_i32_0 = arith.constant 0 : i32
    %c0_i32_1 = arith.constant 0 : i32
    return %c0_i32, %c0_i32_0 : i32, i32
  }
  func.func @transform_8(%arg0: i32) -> (i32, i32) {
    %c0_i32 = arith.constant 0 : i32
    %c0_i32_0 = arith.constant 0 : i32
    %c0_i32_1 = arith.constant 0 : i32
    return %c0_i32, %c0_i32_0 : i32, i32
  }
  func.func @transform_9(%arg0: i32) -> (i32, i32) {
    %c0_i32 = arith.constant 0 : i32
    %c0_i32_0 = arith.constant 0 : i32
    %c0_i32_1 = arith.constant 0 : i32
    return %c0_i32, %c0_i32_0 : i32, i32
  }
  func.func @transform_10(%arg0: i32) -> (i32, i32) {
    %c0_i32 = arith.constant 0 : i32
    %c0_i32_0 = arith.constant 0 : i32
    %c0_i32_1 = arith.constant 0 : i32
    return %c0_i32, %c0_i32_0 : i32, i32
  }
  func.func @transform_11(%arg0: i32) -> (i32, i32) {
    %c0_i32 = arith.constant 0 : i32
    %c0_i32_0 = arith.constant 0 : i32
    %c0_i32_1 = arith.constant 0 : i32
    return %c0_i32, %c0_i32_0 : i32, i32
  }
  func.func @transform_12(%arg0: i32) -> (i32, i32) {
    %c0_i32 = arith.constant 0 : i32
    %c0_i32_0 = arith.constant 0 : i32
    %c0_i32_1 = arith.constant 0 : i32
    return %c0_i32, %c0_i32_0 : i32, i32
  }
  func.func @transform_13(%arg0: i32) -> (i32, i32) {
    %c0_i32 = arith.constant 0 : i32
    %c0_i32_0 = arith.constant 0 : i32
    %c0_i32_1 = arith.constant 0 : i32
    return %c0_i32, %c0_i32_0 : i32, i32
  }
  func.func @transform_14(%arg0: i32) -> (i32, i32) {
    %c0_i32 = arith.constant 0 : i32
    %c0_i32_0 = arith.constant 0 : i32
    %c0_i32_1 = arith.constant 0 : i32
    return %c0_i32, %c0_i32_0 : i32, i32
  }
  func.func @transform_15(%arg0: i32) -> (i32, i32) {
    %c0_i32 = arith.constant 0 : i32
    %c0_i32_0 = arith.constant 0 : i32
    %c0_i32_1 = arith.constant 0 : i32
    return %c0_i32, %c0_i32_0 : i32, i32
  }
  func.func @transform_16(%arg0: i32) -> (i32, i32) {
    %c0_i32 = arith.constant 0 : i32
    %c0_i32_0 = arith.constant 0 : i32
    %c0_i32_1 = arith.constant 0 : i32
    return %c0_i32, %c0_i32_0 : i32, i32
  }
}

</mosaic_0001>

<llo_original>
// kernel: tile.6
$region0: #{tile.6}
  #allocation0 [shape = 's32[1]{0}', space=sflag, size = 0x4, scoped, tag = 'scoped memory for tile.6']
  %s0 = inlined_call_operand.vmem [shape: f32[32], index: 0, kind: input, shape index: {}]
  %s1 = inlined_call_operand.vmem [shape: f32[4,32], index: 1, kind: output, shape index: {}]
  // Predicated region
  $region2: #{tile.6} parent=0 // pred_check
    _
  $region3: #{tile.6} parent=0 // pred_check_branch
    %3 = sbr.rel (0) target = $region5
  $region4: #{tile.6} parent=0 // pred_region
    _
  $region5: #{tile.6} parent=0 // pred_fallthru
    _
  %v4 = vld [vmem:[%s0] ss:$0 sm:$0xff]
  %5 = vst [vmem:[%s1] sm:$0xf] %v4

// kernel: tile.7
$region0: #{tile.7}
  %s0 = inlined_call_operand.vmem [shape: f32[4,32], index: 0, kind: input, shape index: {}]
  %s1 = inlined_call_operand.vmem [shape: f32[1,128], index: 1, kind: output, shape index: {}]
  $region1: #{tile.7} parent=0
    #allocation0 [shape = 'u8[4096]{0}', space=vmem, size = 0x1000, scoped, tag = 'scoped mem for output reshape']
    #allocation1 [shape = 'u8[4096]{0}', space=vmem, size = 0x1000, scoped, tag = 'scoped mem for input reshape']
    %s3 = sshll.u32 1, 4
    %s4 = ssub.s32 %s3, 1
    %v5 = vld [vmem:[%s0] sm:%s4]
    %6 = vst [vmem:[#allocation1] sm:%s4] %v5
    %v7 = vld [vmem:[#allocation1] sm:$0x1]
    %vm8 = vcmask 261120
    %9 = vst.msk [vmem:[#allocation0] sm:$0x1] %vm8, %v7
    %s10 = scalar_lea.vmem [#allocation1], 3
    %v11 = vld [vmem:[%s10] sm:$0x1]
    %12 = vrot.lane.b32.xlu0 %v11, 96
    %v13 = vpop.permute.xlu0 %12
    %vm14 = vcmask 1048320
    %15 = vst.msk [vmem:[#allocation0] sm:$0x1] %vm14, %v13
    %s16 = scalar_lea.vmem [#allocation1], 2
    %v17 = vld [vmem:[%s16] sm:$0x1]
    %18 = vrot.lane.b32.xlu0 %v17, 64
    %v19 = vpop.permute.xlu0 %18
    %vm20 = vcmask 785920
    %21 = vst.msk [vmem:[#allocation0] sm:$0x1] %vm20, %v19
    %s22 = scalar_lea.vmem [#allocation1], 1
    %v23 = vld [vmem:[%s22] sm:$0x1]
    %24 = vrot.lane.b32.xlu0 %v23, 32
    %v25 = vpop.permute.xlu0 %24
    %vm26 = vcmask 523520
    %27 = vst.msk [vmem:[#allocation0] sm:$0x1] %vm26, %v25
    %s29 = sshll.u32 1, 1
    %s30 = ssub.s32 %s29, 1
    %v32 = vld [vmem:[#allocation0] sm:%s30]
    %s33 = sshll.u32 1, 1
    %s34 = ssub.s32 %s33, 1
    %35 = vst [vmem:[%s1] sm:%s34] %v32

// kernel: netae_forward.1
$region0: #{netae_forward.1}
  #allocation0 [shape = 'u32[]', space=smem, size = 0x4, offset = 0x4, fixed_abs, tag = 'smem constant byte address 0x4 - core index']
  #allocation1 [shape = 'u32[144,128]{1,0:T(1,128)}', space=vmem, size = 0x12000, scoped, tag = 'internal scratch']
  %s0 = inlined_call_operand.vmem [shape: f32[8,32], index: 0, kind: input, shape index: {}]
  %s1 = inlined_call_operand.hbm [shape: f32[32,128], index: 1, kind: input, shape index: {}]
  %s2 = inlined_call_operand.vmem [shape: f32[1,128], index: 2, kind: input, shape index: {}]
  %s3 = inlined_call_operand.hbm [shape: f32[128,128], index: 3, kind: input, shape index: {}]
  %s4 = inlined_call_operand.vmem [shape: f32[1,128], index: 4, kind: input, shape index: {}]
  %s5 = inlined_call_operand.hbm [shape: f32[128,128], index: 5, kind: input, shape index: {}]
  %s6 = inlined_call_operand.vmem [shape: f32[1,128], index: 6, kind: input, shape index: {}]
  %s7 = inlined_call_operand.hbm [shape: f32[128,128], index: 7, kind: input, shape index: {}]
  %s8 = inlined_call_operand.vmem [shape: f32[1,128], index: 8, kind: input, shape index: {}]
  %s9 = inlined_call_operand.vmem [shape: f32[1,128], index: 9, kind: input, shape index: {}]
  %s10 = inlined_call_operand.hbm [shape: f32[128,128], index: 10, kind: input, shape index: {}]
  %s11 = inlined_call_operand.hbm [shape: f32[128,128], index: 11, kind: input, shape index: {}]
  %s12 = inlined_call_operand.hbm [shape: f32[128,128], index: 12, kind: input, shape index: {}]
  %s13 = inlined_call_operand.vmem [shape: f32[1,128], index: 13, kind: input, shape index: {}]
  %s14 = inlined_call_operand.hbm [shape: f32[128,128], index: 14, kind: input, shape index: {}]
  %s15 = inlined_call_operand.vmem [shape: f32[1,128], index: 15, kind: input, shape index: {}]
  %s16 = inlined_call_operand.vmem [shape: f32[8,128], index: 16, kind: output, shape index: {}]
  %s17 = sld [smem:[#allocation0]]
  $region106: #{netae_forward.1} parent=0
    _
  %s19 = ssub.s32 1, %s17
  %s20 = scalar_select 0, %s19, %s17
  $region1: #{netae_forward.1} parent=0
    #allocation2 [shape = 'u8[16384]{0}', space=vmem, size = 0x4000, scoped, tag = 'input window, operand 1, single buffered']
    #allocation3 [shape = 's32[1]{0}', space=sflag, size = 0x4, scoped, tag = 'scoped memory for netae_forward.1']
    #allocation4 [shape = 'u8[65536]{0}', space=vmem, size = 0x10000, scoped, tag = 'input window, operand 3, single buffered']
    #allocation5 [shape = 's32[1]{0}', space=sflag, size = 0x4, scoped, tag = 'scoped memory for netae_forward.1']
    #allocation6 [shape = 'u8[65536]{0}', space=vmem, size = 0x10000, scoped, tag = 'input window, operand 5, single buffered']
    #allocation7 [shape = 'u8[65536]{0}', space=vmem, size = 0x10000, scoped, tag = 'input window, operand 7, single buffered']
    #allocation8 [shape = 's32[1]{0}', space=sflag, size = 0x4, scoped, tag = 'scoped memory for netae_forward.1']
    #allocation9 [shape = 'u8[65536]{0}', space=vmem, size = 0x10000, scoped, tag = 'input window, operand 10, single buffered']
    #allocation10 [shape = 'u8[65536]{0}', space=vmem, size = 0x10000, scoped, tag = 'input window, operand 11, single buffered']
    #allocation11 [shape = 's32[1]{0}', space=sflag, size = 0x4, scoped, tag = 'scoped memory for netae_forward.1']
    #allocation12 [shape = 'u8[65536]{0}', space=vmem, size = 0x10000, scoped, tag = 'input window, operand 12, single buffered']
    #allocation13 [shape = 'u8[65536]{0}', space=vmem, size = 0x10000, scoped, tag = 'input window, operand 14, single buffered']
    #allocation14 [shape = 's32[1]{0}', space=sflag, size = 0x4, scoped, tag = 'scoped memory for netae_forward.1']
    %21 = vsyncpa [#allocation3], 0
    %22 = vsyncpa [#allocation5], 0
    %23 = vsyncpa [#allocation8], 0
    %24 = vsyncpa [#allocation11], 0
    %25 = vsyncpa [#allocation14], 0
    // Predicated region
    $region2: #{netae_forward.1} parent=1 // pred_check
      _
    $region3: #{netae_forward.1} parent=1 // pred_check_branch
      %27 = sbr.rel (0) target = $region5
    $region4: #{netae_forward.1} parent=1 // pred_region
      _
    $region5: #{netae_forward.1} parent=1 // pred_fallthru
      _
    // Predicated region
    $region6: #{netae_forward.1} parent=1 // pred_check
      _
    $region7: #{netae_forward.1} parent=1 // pred_check_branch
      %29 = sbr.rel (0) target = $region9
    $region8: #{netae_forward.1} parent=1 // pred_region
      %s31 = ssub.s32 512, 512
      %32 = vsyncadd [#allocation3], %s31
      %s33 = sshll.u32 [#allocation2], 4
      %s34 = int_to_ptr.vmem [resolvable:$true] %s33
      %39 = dma.hbm_to_vmem [thread:$0]  %s1, 512, %s34, [#allocation3], 128, 128, 8
    $region9: #{netae_forward.1} parent=1 // pred_fallthru
      _
    // Predicated region
    $region10: #{netae_forward.1} parent=1 // pred_check
      _
    $region11: #{netae_forward.1} parent=1 // pred_check_branch
      %41 = sbr.rel (0) target = $region13
    $region12: #{netae_forward.1} parent=1 // pred_region
      _
    $region13: #{netae_forward.1} parent=1 // pred_fallthru
      _
    // Predicated region
    $region14: #{netae_forward.1} parent=1 // pred_check
      _
    $region15: #{netae_forward.1} parent=1 // pred_check_branch
      %43 = sbr.rel (0) target = $region17
    $region16: #{netae_forward.1} parent=1 // pred_region
      %s45 = ssub.s32 2048, 2048
      %46 = vsyncadd [#allocation5], %s45
      %s47 = sshll.u32 [#allocation4], 4
      %s48 = int_to_ptr.vmem [resolvable:$true] %s47
      %53 = dma.hbm_to_vmem [thread:$0]  %s3, 2048, %s48, [#allocation5], 128, 128, 8
    $region17: #{netae_forward.1} parent=1 // pred_fallthru
      _
    // Predicated region
    $region18: #{netae_forward.1} parent=1 // pred_check
      _
    $region19: #{netae_forward.1} parent=1 // pred_check_branch
      %55 = sbr.rel (0) target = $region21
    $region20: #{netae_forward.1} parent=1 // pred_region
      _
    $region21: #{netae_forward.1} parent=1 // pred_fallthru
      _
    // Predicated region
    $region22: #{netae_forward.1} parent=1 // pred_check
      _
    $region23: #{netae_forward.1} parent=1 // pred_check_branch
      %57 = sbr.rel (0) target = $region25
    $region24: #{netae_forward.1} parent=1 // pred_region
      %s59 = ssub.s32 2048, 2048
      %60 = vsyncadd [#allocation5], %s59
      %s61 = sshll.u32 [#allocation6], 4
      %s62 = int_to_ptr.vmem [resolvable:$true] %s61
      %67 = dma.hbm_to_vmem [thread:$0]  %s5, 2048, %s62, [#allocation5], 128, 128, 8
    $region25: #{netae_forward.1} parent=1 // pred_fallthru
      _
    // Predicated region
    $region26: #{netae_forward.1} parent=1 // pred_check
      _
    $region27: #{netae_forward.1} parent=1 // pred_check_branch
      %69 = sbr.rel (0) target = $region29
    $region28: #{netae_forward.1} parent=1 // pred_region
      _
    $region29: #{netae_forward.1} parent=1 // pred_fallthru
      _
    // Predicated region
    $region30: #{netae_forward.1} parent=1 // pred_check
      _
    $region31: #{netae_forward.1} parent=1 // pred_check_branch
      %71 = sbr.rel (0) target = $region33
    $region32: #{netae_forward.1} parent=1 // pred_region
      %s73 = ssub.s32 2048, 2048
      %74 = vsyncadd [#allocation8], %s73
      %s75 = sshll.u32 [#allocation7], 4
      %s76 = int_to_ptr.vmem [resolvable:$true] %s75
      %81 = dma.hbm_to_vmem [thread:$0]  %s7, 2048, %s76, [#allocation8], 128, 128, 8
    $region33: #{netae_forward.1} parent=1 // pred_fallthru
      _
    // Predicated region
    $region34: #{netae_forward.1} parent=1 // pred_check
      _
    $region35: #{netae_forward.1} parent=1 // pred_check_branch
      %83 = sbr.rel (0) target = $region37
    $region36: #{netae_forward.1} parent=1 // pred_region
      _
    $region37: #{netae_forward.1} parent=1 // pred_fallthru
      _
    // Predicated region
    $region38: #{netae_forward.1} parent=1 // pred_check
      _
    $region39: #{netae_forward.1} parent=1 // pred_check_branch
      %85 = sbr.rel (0) target = $region41
    $region40: #{netae_forward.1} parent=1 // pred_region
      _
    $region41: #{netae_forward.1} parent=1 // pred_fallthru
      _
    // Predicated region
    $region42: #{netae_forward.1} parent=1 // pred_check
      _
    $region43: #{netae_forward.1} parent=1 // pred_check_branch
      %87 = sbr.rel (0) target = $region45
    $region44: #{netae_forward.1} parent=1 // pred_region
      %s89 = ssub.s32 2048, 2048
      %90 = vsyncadd [#allocation8], %s89
      %s91 = sshll.u32 [#allocation9], 4
      %s92 = int_to_ptr.vmem [resolvable:$true] %s91
      %97 = dma.hbm_to_vmem [thread:$0]  %s10, 2048, %s92, [#allocation8], 128, 128, 8
    $region45: #{netae_forward.1} parent=1 // pred_fallthru
      _
    // Predicated region
    $region46: #{netae_forward.1} parent=1 // pred_check
      _
    $region47: #{netae_forward.1} parent=1 // pred_check_branch
      %99 = sbr.rel (0) target = $region49
    $region48: #{netae_forward.1} parent=1 // pred_region
      %s101 = ssub.s32 2048, 2048
      %102 = vsyncadd [#allocation11], %s101
      %s103 = sshll.u32 [#allocation10], 4
      %s104 = int_to_ptr.vmem [resolvable:$true] %s103
      %109 = dma.hbm_to_vmem [thread:$0]  %s11, 2048, %s104, [#allocation11], 128, 128, 8
    $region49: #{netae_forward.1} parent=1 // pred_fallthru
      _
    // Predicated region
    $region50: #{netae_forward.1} parent=1 // pred_check
      _
    $region51: #{netae_forward.1} parent=1 // pred_check_branch
      %111 = sbr.rel (0) target = $region53
    $region52: #{netae_forward.1} parent=1 // pred_region
      %s113 = ssub.s32 2048, 2048
      %114 = vsyncadd [#allocation11], %s113
      %s115 = sshll.u32 [#allocation12], 4
      %s116 = int_to_ptr.vmem [resolvable:$true] %s115
      %121 = dma.hbm_to_vmem [thread:$0]  %s12, 2048, %s116, [#allocation11], 128, 128, 8
    $region53: #{netae_forward.1} parent=1 // pred_fallthru
      _
    // Predicated region
    $region54: #{netae_forward.1} parent=1 // pred_check
      _
    $region55: #{netae_forward.1} parent=1 // pred_check_branch
      %123 = sbr.rel (0) target = $region57
    $region56: #{netae_forward.1} parent=1 // pred_region
      _
    $region57: #{netae_forward.1} parent=1 // pred_fallthru
      _
    // Predicated region
    $region58: #{netae_forward.1} parent=1 // pred_check
      _
    $region59: #{netae_forward.1} parent=1 // pred_check_branch
      %125 = sbr.rel (0) target = $region61
    $region60: #{netae_forward.1} parent=1 // pred_region
      %s127 = ssub.s32 2048, 2048
      %128 = vsyncadd [#allocation14], %s127
      %s129 = sshll.u32 [#allocation13], 4
      %s130 = int_to_ptr.vmem [resolvable:$true] %s129
      %135 = dma.hbm_to_vmem [thread:$0]  %s14, 2048, %s130, [#allocation14], 128, 128, 8
    $region61: #{netae_forward.1} parent=1 // pred_fallthru
      _
    // Predicated region
    $region62: #{netae_forward.1} parent=1 // pred_check
      _
    $region63: #{netae_forward.1} parent=1 // pred_check_branch
      %137 = sbr.rel (0) target = $region65
    $region64: #{netae_forward.1} parent=1 // pred_region
      _
    $region65: #{netae_forward.1} parent=1 // pred_fallthru
      _
    // Predicated region
    $region66: #{netae_forward.1} parent=1 // pred_check
      _
    $region67: #{netae_forward.1} parent=1 // pred_check_branch
      %139 = sbr.rel (0) target = $region69
    $region68: #{netae_forward.1} parent=1 // pred_region
      %140 = dma.done [#allocation3], 512
    $region69: #{netae_forward.1} parent=1 // pred_fallthru
      _
    // Predicated region
    $region70: #{netae_forward.1} parent=1 // pred_check
      _
    $region71: #{netae_forward.1} parent=1 // pred_check_branch
      %142 = sbr.rel (0) target = $region73
    $region72: #{netae_forward.1} parent=1 // pred_region
      %143 = dma.done [#allocation5], 2048
    $region73: #{netae_forward.1} parent=1 // pred_fallthru
      _
    // Predicated region
    $region74: #{netae_forward.1} parent=1 // pred_check
      _
    $region75: #{netae_forward.1} parent=1 // pred_check_branch
      %145 = sbr.rel (0) target = $region77
    $region76: #{netae_forward.1} parent=1 // pred_region
      %146 = dma.done [#allocation5], 2048
    $region77: #{netae_forward.1} parent=1 // pred_fallthru
      _
    // Predicated region
    $region78: #{netae_forward.1} parent=1 // pred_check
      _
    $region79: #{netae_forward.1} parent=1 // pred_check_branch
      %148 = sbr.rel (0) target = $region81
    $region80: #{netae_forward.1} parent=1 // pred_region
      %149 = dma.done [#allocation8], 2048
    $region81: #{netae_forward.1} parent=1 // pred_fallthru
      _
    // Predicated region
    $region82: #{netae_forward.1} parent=1 // pred_check
      _
    $region83: #{netae_forward.1} parent=1 // pred_check_branch
      %151 = sbr.rel (0) target = $region85
    $region84: #{netae_forward.1} parent=1 // pred_region
      %152 = dma.done [#allocation8], 2048
    $region85: #{netae_forward.1} parent=1 // pred_fallthru
      _
    // Predicated region
    $region86: #{netae_forward.1} parent=1 // pred_check
      _
    $region87: #{netae_forward.1} parent=1 // pred_check_branch
      %154 = sbr.rel (0) target = $region89
    $region88: #{netae_forward.1} parent=1 // pred_region
      %155 = dma.done [#allocation11], 2048
    $region89: #{netae_forward.1} parent=1 // pred_fallthru
      _
    // Predicated region
    $region90: #{netae_forward.1} parent=1 // pred_check
      _
    $region91: #{netae_forward.1} parent=1 // pred_check_branch
      %157 = sbr.rel (0) target = $region93
    $region92: #{netae_forward.1} parent=1 // pred_region
      %158 = dma.done [#allocation11], 2048
    $region93: #{netae_forward.1} parent=1 // pred_fallthru
      _
    // Predicated region
    $region94: #{netae_forward.1} parent=1 // pred_check
      _
    $region95: #{netae_forward.1} parent=1 // pred_check_branch
      %160 = sbr.rel (0) target = $region97
    $region96: #{netae_forward.1} parent=1 // pred_region
      %161 = dma.done [#allocation14], 2048
    $region97: #{netae_forward.1} parent=1 // pred_fallthru
      _
    %v162 = vld [vmem:[%s0] sm:$0xff]
    %v163 = vld [vmem:[#allocation2] sm:$0xff]
    %v164 = vld [vmem:[#allocation2 + $0x8] sm:$0xff]
    %v165 = vld [vmem:[#allocation2 + $0x10] sm:$0xff]
    %v166 = vld [vmem:[#allocation2 + $0x18] sm:$0xff]
    %v167 = vld [vmem:[%s2] sm:$0x1]
    %v169 = vlaneseq
    %v170 = vshrl.u32 %v169, 7
    %v171 = vsub.s32 0, %v170
    %v172 = vrot.slane %v167, %v171
    %vm174 = vcmask 261120
    %v176 = vsel %vm174, %v162, 0
    %178 = vmatprep.subr.mxu0 0.0
    %179 = vmatpush1.msra.mxu0 0.0
    %180 = vmatprep.subr.mxu0 0.0
    %181 = vmatpush1.msra.mxu0 0.0
    %182 = vmatprep.subr.mxu0 0.0
    %183 = vmatpush1.msra.mxu0 0.0
    %184 = vmatprep.subr.mxu0 0.0
    %185 = vmatpush1.msra.mxu0 0.0
    %186 = vmatprep.subr.mxu0 0.0
    %187 = vmatpush1.msra.mxu0 0.0
    %188 = vmatprep.subr.mxu0 0.0
    %189 = vmatpush1.msra.mxu0 0.0
    %190 = vmatprep.subr.mxu0 0.0
    %191 = vmatpush1.msra.mxu0 0.0
    %192 = vmatprep.subr.mxu0 0.0
    %193 = vmatpush1.msra.mxu0 0.0
    %194 = vmatprep.subr.mxu0 0.0
    %195 = vmatpush1.msra.mxu0 0.0
    %196 = vmatprep.subr.mxu0 0.0
    %197 = vmatpush1.msra.mxu0 0.0
    %198 = vmatprep.subr.mxu0 0.0
    %199 = vmatpush1.msra.mxu0 0.0
    %200 = vmatprep.subr.mxu0 0.0
    %201 = vmatpush1.msra.mxu0 0.0
    %202 = vmatprep.subr.mxu0 0.0
    %203 = vmatpush1.msra.mxu0 %v166
    %204 = vmatprep.subr.mxu0 0.0
    %205 = vmatpush1.msra.mxu0 %v165
    %206 = vmatprep.subr.mxu0 0.0
    %207 = vmatpush1.msra.mxu0 %v164
    %208 = vmatprep.subr.mxu0 0.0
    %209 = vmatpush1.msra.mxu0 %v163
    %210 = vmatprep.subr.mxu0 0.0
    %211 = vmatpush2.msra.mxu0 0.0
    %212 = vmatprep.subr.mxu0 0.0
    %213 = vmatpush2.msra.mxu0 0.0
    %214 = vmatprep.subr.mxu0 0.0
    %215 = vmatpush2.msra.mxu0 0.0
    %216 = vmatprep.subr.mxu0 0.0
    %217 = vmatpush2.msra.mxu0 0.0
    %218 = vmatprep.subr.mxu0 0.0
    %219 = vmatpush2.msra.mxu0 0.0
    %220 = vmatprep.subr.mxu0 0.0
    %221 = vmatpush2.msra.mxu0 0.0
    %222 = vmatprep.subr.mxu0 0.0
    %223 = vmatpush2.msra.mxu0 0.0
    %224 = vmatprep.subr.mxu0 0.0
    %225 = vmatpush2.msra.mxu0 0.0
    %226 = vmatprep.subr.mxu0 0.0
    %227 = vmatpush2.msra.mxu0 0.0
    %228 = vmatprep.subr.mxu0 0.0
    %229 = vmatpush2.msra.mxu0 0.0
    %230 = vmatprep.subr.mxu0 0.0
    %231 = vmatpush2.msra.mxu0 0.0
    %232 = vmatprep.subr.mxu0 0.0
    %233 = vmatpush2.msra.mxu0 0.0
    %234 = vmatprep.subr.mxu0 0.0
    %235 = vmatpush2.msra.mxu0 0.0
    %236 = vmatprep.subr.mxu0 0.0
    %237 = vmatpush2.msra.mxu0 0.0
    %238 = vmatprep.subr.mxu0 0.0
    %239 = vmatpush2.msra.mxu0 0.0
    %240 = vmatprep.subr.mxu0 0.0
    %241 = vmatpush2.msra.mxu0 0.0
    %242 = vmatprep.mubr.f32.mxu0 0.0
    %243 = vmatmul.mubr.f32.gmra.mxu0 %v176
    %v244 = vpop.f32.mrf.mxu0
    %v245 = vadd.f32 %v172, %v244
    %v246 = vpop.f32.mrf.mxu0
    %247 = vdwg.mxu0
    %v248 = vmax.f32 %v245, 0.0
    %v249 = vld [vmem:[#allocation4] sm:$0xff]
    %v250 = vld [vmem:[#allocation4 + $0x8] sm:$0xff]
    %v251 = vld [vmem:[#allocation4 + $0x10] sm:$0xff]
    %v252 = vld [vmem:[#allocation4 + $0x18] sm:$0xff]
    %v253 = vld [vmem:[#allocation4 + $0x20] sm:$0xff]
    %v254 = vld [vmem:[#allocation4 + $0x28] sm:$0xff]
    %v255 = vld [vmem:[#allocation4 + $0x30] sm:$0xff]
    %v256 = vld [vmem:[#allocation4 + $0x38] sm:$0xff]
    %v257 = vld [vmem:[#allocation4 + $0x40] sm:$0xff]
    %v258 = vld [vmem:[#allocation4 + $0x48] sm:$0xff]
    %v259 = vld [vmem:[#allocation4 + $0x50] sm:$0xff]
    %v260 = vld [vmem:[#allocation4 + $0x58] sm:$0xff]
    %v261 = vld [vmem:[#allocation4 + $0x60] sm:$0xff]
    %v262 = vld [vmem:[#allocation4 + $0x68] sm:$0xff]
    %v263 = vld [vmem:[#allocation4 + $0x70] sm:$0xff]
    %v264 = vld [vmem:[#allocation4 + $0x78] sm:$0xff]
    %v265 = vld [vmem:[%s4] sm:$0x1]
    %v267 = vlaneseq
    %v268 = vshrl.u32 %v267, 7
    %v269 = vsub.s32 0, %v268
    %v270 = vrot.slane %v265, %v269
    %272 = vmatprep.subr.mxu0 0.0
    %273 = vmatpush1.msra.mxu0 %v264
    %274 = vmatprep.subr.mxu0 0.0
    %275 = vmatpush1.msra.mxu0 %v263
    %276 = vmatprep.subr.mxu0 0.0
    %277 = vmatpush1.msra.mxu0 %v262
    %278 = vmatprep.subr.mxu0 0.0
    %279 = vmatpush1.msra.mxu0 %v261
    %280 = vmatprep.subr.mxu0 0.0
    %281 = vmatpush1.msra.mxu0 %v260
    %282 = vmatprep.subr.mxu0 0.0
    %283 = vmatpush1.msra.mxu0 %v259
    %284 = vmatprep.subr.mxu0 0.0
    %285 = vmatpush1.msra.mxu0 %v258
    %286 = vmatprep.subr.mxu0 0.0
    %287 = vmatpush1.msra.mxu0 %v257
    %288 = vmatprep.subr.mxu0 0.0
    %289 = vmatpush1.msra.mxu0 %v256
    %290 = vmatprep.subr.mxu0 0.0
    %291 = vmatpush1.msra.mxu0 %v255
    %292 = vmatprep.subr.mxu0 0.0
    %293 = vmatpush1.msra.mxu0 %v254
    %294 = vmatprep.subr.mxu0 0.0
    %295 = vmatpush1.msra.mxu0 %v253
    %296 = vmatprep.subr.mxu0 0.0
    %297 = vmatpush1.msra.mxu0 %v252
    %298 = vmatprep.subr.mxu0 0.0
    %299 = vmatpush1.msra.mxu0 %v251
    %300 = vmatprep.subr.mxu0 0.0
    %301 = vmatpush1.msra.mxu0 %v250
    %302 = vmatprep.subr.mxu0 0.0
    %303 = vmatpush1.msra.mxu0 %v249
    %304 = vmatprep.subr.mxu0 0.0
    %305 = vmatpush2.msra.mxu0 0.0
    %306 = vmatprep.subr.mxu0 0.0
    %307 = vmatpush2.msra.mxu0 0.0
    %308 = vmatprep.subr.mxu0 0.0
    %309 = vmatpush2.msra.mxu0 0.0
    %310 = vmatprep.subr.mxu0 0.0
    %311 = vmatpush2.msra.mxu0 0.0
    %312 = vmatprep.subr.mxu0 0.0
    %313 = vmatpush2.msra.mxu0 0.0
    %314 = vmatprep.subr.mxu0 0.0
    %315 = vmatpush2.msra.mxu0 0.0
    %316 = vmatprep.subr.mxu0 0.0
    %317 = vmatpush2.msra.mxu0 0.0
    %318 = vmatprep.subr.mxu0 0.0
    %319 = vmatpush2.msra.mxu0 0.0
    %320 = vmatprep.subr.mxu0 0.0
    %321 = vmatpush2.msra.mxu0 0.0
    %322 = vmatprep.subr.mxu0 0.0
    %323 = vmatpush2.msra.mxu0 0.0
    %324 = vmatprep.subr.mxu0 0.0
    %325 = vmatpush2.msra.mxu0 0.0
    %326 = vmatprep.subr.mxu0 0.0
    %327 = vmatpush2.msra.mxu0 0.0
    %328 = vmatprep.subr.mxu0 0.0
    %329 = vmatpush2.msra.mxu0 0.0
    %330 = vmatprep.subr.mxu0 0.0
    %331 = vmatpush2.msra.mxu0 0.0
    %332 = vmatprep.subr.mxu0 0.0
    %333 = vmatpush2.msra.mxu0 0.0
    %334 = vmatprep.subr.mxu0 0.0
    %335 = vmatpush2.msra.mxu0 0.0
    %336 = vmatprep.mubr.f32.mxu0 0.0
    %337 = vmatmul.mubr.f32.gmra.mxu0 %v248
    %v338 = vpop.f32.mrf.mxu0
    %v339 = vadd.f32 %v270, %v338
    %v340 = vpop.f32.mrf.mxu0
    %341 = vdwg.mxu0
    %v342 = vmax.f32 %v339, 0.0
    %v343 = vld [vmem:[#allocation6] sm:$0xff]
    %v344 = vld [vmem:[#allocation6 + $0x8] sm:$0xff]
    %v345 = vld [vmem:[#allocation6 + $0x10] sm:$0xff]
    %v346 = vld [vmem:[#allocation6 + $0x18] sm:$0xff]
    %v347 = vld [vmem:[#allocation6 + $0x20] sm:$0xff]
    %v348 = vld [vmem:[#allocation6 + $0x28] sm:$0xff]
    %v349 = vld [vmem:[#allocation6 + $0x30] sm:$0xff]
    %v350 = vld [vmem:[#allocation6 + $0x38] sm:$0xff]
    %v351 = vld [vmem:[#allocation6 + $0x40] sm:$0xff]
    %v352 = vld [vmem:[#allocation6 + $0x48] sm:$0xff]
    %v353 = vld [vmem:[#allocation6 + $0x50] sm:$0xff]
    %v354 = vld [vmem:[#allocation6 + $0x58] sm:$0xff]
    %v355 = vld [vmem:[#allocation6 + $0x60] sm:$0xff]
    %v356 = vld [vmem:[#allocation6 + $0x68] sm:$0xff]
    %v357 = vld [vmem:[#allocation6 + $0x70] sm:$0xff]
    %v358 = vld [vmem:[#allocation6 + $0x78] sm:$0xff]
    %v359 = vld [vmem:[%s6] sm:$0x1]
    %v361 = vlaneseq
    %v362 = vshrl.u32 %v361, 7
    %v363 = vsub.s32 0, %v362
    %v364 = vrot.slane %v359, %v363
    %366 = vmatprep.subr.mxu0 0.0
    %367 = vmatpush1.msra.mxu0 %v358
    %368 = vmatprep.subr.mxu0 0.0
    %369 = vmatpush1.msra.mxu0 %v357
    %370 = vmatprep.subr.mxu0 0.0
    %371 = vmatpush1.msra.mxu0 %v356
    %372 = vmatprep.subr.mxu0 0.0
    %373 = vmatpush1.msra.mxu0 %v355
    %374 = vmatprep.subr.mxu0 0.0
    %375 = vmatpush1.msra.mxu0 %v354
    %376 = vmatprep.subr.mxu0 0.0
    %377 = vmatpush1.msra.mxu0 %v353
    %378 = vmatprep.subr.mxu0 0.0
    %379 = vmatpush1.msra.mxu0 %v352
    %380 = vmatprep.subr.mxu0 0.0
    %381 = vmatpush1.msra.mxu0 %v351
    %382 = vmatprep.subr.mxu0 0.0
    %383 = vmatpush1.msra.mxu0 %v350
    %384 = vmatprep.subr.mxu0 0.0
    %385 = vmatpush1.msra.mxu0 %v349
    %386 = vmatprep.subr.mxu0 0.0
    %387 = vmatpush1.msra.mxu0 %v348
    %388 = vmatprep.subr.mxu0 0.0
    %389 = vmatpush1.msra.mxu0 %v347
    %390 = vmatprep.subr.mxu0 0.0
    %391 = vmatpush1.msra.mxu0 %v346
    %392 = vmatprep.subr.mxu0 0.0
    %393 = vmatpush1.msra.mxu0 %v345
    %394 = vmatprep.subr.mxu0 0.0
    %395 = vmatpush1.msra.mxu0 %v344
    %396 = vmatprep.subr.mxu0 0.0
    %397 = vmatpush1.msra.mxu0 %v343
    %398 = vmatprep.subr.mxu0 0.0
    %399 = vmatpush2.msra.mxu0 0.0
    %400 = vmatprep.subr.mxu0 0.0
    %401 = vmatpush2.msra.mxu0 0.0
    %402 = vmatprep.subr.mxu0 0.0
    %403 = vmatpush2.msra.mxu0 0.0
    %404 = vmatprep.subr.mxu0 0.0
    %405 = vmatpush2.msra.mxu0 0.0
    %406 = vmatprep.subr.mxu0 0.0
    %407 = vmatpush2.msra.mxu0 0.0
    %408 = vmatprep.subr.mxu0 0.0
    %409 = vmatpush2.msra.mxu0 0.0
    %410 = vmatprep.subr.mxu0 0.0
    %411 = vmatpush2.msra.mxu0 0.0
    %412 = vmatprep.subr.mxu0 0.0
    %413 = vmatpush2.msra.mxu0 0.0
    %414 = vmatprep.subr.mxu0 0.0
    %415 = vmatpush2.msra.mxu0 0.0
    %416 = vmatprep.subr.mxu0 0.0
    %417 = vmatpush2.msra.mxu0 0.0
    %418 = vmatprep.subr.mxu0 0.0
    %419 = vmatpush2.msra.mxu0 0.0
    %420 = vmatprep.subr.mxu0 0.0
    %421 = vmatpush2.msra.mxu0 0.0
    %422 = vmatprep.subr.mxu0 0.0
    %423 = vmatpush2.msra.mxu0 0.0
    %424 = vmatprep.subr.mxu0 0.0
    %425 = vmatpush2.msra.mxu0 0.0
    %426 = vmatprep.subr.mxu0 0.0
    %427 = vmatpush2.msra.mxu0 0.0
    %428 = vmatprep.subr.mxu0 0.0
    %429 = vmatpush2.msra.mxu0 0.0
    %430 = vmatprep.mubr.f32.mxu0 0.0
    %431 = vmatmul.mubr.f32.gmra.mxu0 %v342
    %v432 = vpop.f32.mrf.mxu0
    %v433 = vadd.f32 %v364, %v432
    %v434 = vpop.f32.mrf.mxu0
    %435 = vdwg.mxu0
    %v436 = vld [vmem:[#allocation7] sm:$0xff]
    %v437 = vld [vmem:[#allocation7 + $0x8] sm:$0xff]
    %v438 = vld [vmem:[#allocation7 + $0x10] sm:$0xff]
    %v439 = vld [vmem:[#allocation7 + $0x18] sm:$0xff]
    %v440 = vld [vmem:[#allocation7 + $0x20] sm:$0xff]
    %v441 = vld [vmem:[#allocation7 + $0x28] sm:$0xff]
    %v442 = vld [vmem:[#allocation7 + $0x30] sm:$0xff]
    %v443 = vld [vmem:[#allocation7 + $0x38] sm:$0xff]
    %v444 = vld [vmem:[#allocation7 + $0x40] sm:$0xff]
    %v445 = vld [vmem:[#allocation7 + $0x48] sm:$0xff]
    %v446 = vld [vmem:[#allocation7 + $0x50] sm:$0xff]
    %v447 = vld [vmem:[#allocation7 + $0x58] sm:$0xff]
    %v448 = vld [vmem:[#allocation7 + $0x60] sm:$0xff]
    %v449 = vld [vmem:[#allocation7 + $0x68] sm:$0xff]
    %v450 = vld [vmem:[#allocation7 + $0x70] sm:$0xff]
    %v451 = vld [vmem:[#allocation7 + $0x78] sm:$0xff]
    %v452 = vld [vmem:[%s8] sm:$0x1]
    %v454 = vlaneseq
    %v455 = vshrl.u32 %v454, 7
    %v456 = vsub.s32 0, %v455
    %v457 = vrot.slane %v452, %v456
    %459 = vmatprep.subr.mxu0 0.0
    %460 = vmatpush1.msra.mxu0 %v451
    %461 = vmatprep.subr.mxu0 0.0
    %462 = vmatpush1.msra.mxu0 %v450
    %463 = vmatprep.subr.mxu0 0.0
    %464 = vmatpush1.msra.mxu0 %v449
    %465 = vmatprep.subr.mxu0 0.0
    %466 = vmatpush1.msra.mxu0 %v448
    %467 = vmatprep.subr.mxu0 0.0
    %468 = vmatpush1.msra.mxu0 %v447
    %469 = vmatprep.subr.mxu0 0.0
    %470 = vmatpush1.msra.mxu0 %v446
    %471 = vmatprep.subr.mxu0 0.0
    %472 = vmatpush1.msra.mxu0 %v445
    %473 = vmatprep.subr.mxu0 0.0
    %474 = vmatpush1.msra.mxu0 %v444
    %475 = vmatprep.subr.mxu0 0.0
    %476 = vmatpush1.msra.mxu0 %v443
    %477 = vmatprep.subr.mxu0 0.0
    %478 = vmatpush1.msra.mxu0 %v442
    %479 = vmatprep.subr.mxu0 0.0
    %480 = vmatpush1.msra.mxu0 %v441
    %481 = vmatprep.subr.mxu0 0.0
    %482 = vmatpush1.msra.mxu0 %v440
    %483 = vmatprep.subr.mxu0 0.0
    %484 = vmatpush1.msra.mxu0 %v439
    %485 = vmatprep.subr.mxu0 0.0
    %486 = vmatpush1.msra.mxu0 %v438
    %487 = vmatprep.subr.mxu0 0.0
    %488 = vmatpush1.msra.mxu0 %v437
    %489 = vmatprep.subr.mxu0 0.0
    %490 = vmatpush1.msra.mxu0 %v436
    %491 = vmatprep.subr.mxu0 0.0
    %492 = vmatpush2.msra.mxu0 0.0
    %493 = vmatprep.subr.mxu0 0.0
    %494 = vmatpush2.msra.mxu0 0.0
    %495 = vmatprep.subr.mxu0 0.0
    %496 = vmatpush2.msra.mxu0 0.0
    %497 = vmatprep.subr.mxu0 0.0
    %498 = vmatpush2.msra.mxu0 0.0
    %499 = vmatprep.subr.mxu0 0.0
    %500 = vmatpush2.msra.mxu0 0.0
    %501 = vmatprep.subr.mxu0 0.0
    %502 = vmatpush2.msra.mxu0 0.0
    %503 = vmatprep.subr.mxu0 0.0
    %504 = vmatpush2.msra.mxu0 0.0
    %505 = vmatprep.subr.mxu0 0.0
    %506 = vmatpush2.msra.mxu0 0.0
    %507 = vmatprep.subr.mxu0 0.0
    %508 = vmatpush2.msra.mxu0 0.0
    %509 = vmatprep.subr.mxu0 0.0
    %510 = vmatpush2.msra.mxu0 0.0
    %511 = vmatprep.subr.mxu0 0.0
    %512 = vmatpush2.msra.mxu0 0.0
    %513 = vmatprep.subr.mxu0 0.0
    %514 = vmatpush2.msra.mxu0 0.0
    %515 = vmatprep.subr.mxu0 0.0
    %516 = vmatpush2.msra.mxu0 0.0
    %517 = vmatprep.subr.mxu0 0.0
    %518 = vmatpush2.msra.mxu0 0.0
    %519 = vmatprep.subr.mxu0 0.0
    %520 = vmatpush2.msra.mxu0 0.0
    %521 = vmatprep.subr.mxu0 0.0
    %522 = vmatpush2.msra.mxu0 0.0
    %523 = vmatprep.mubr.f32.mxu0 0.0
    %524 = vmatmul.mubr.f32.gmra.mxu0 %v342
    %v525 = vpop.f32.mrf.mxu0
    %v526 = vadd.f32 %v457, %v525
    %v527 = vpop.f32.mrf.mxu0
    %528 = vdwg.mxu0
    %v529 = vld [vmem:[%s9] sm:$0x1]
    %v531 = vlaneseq
    %v532 = vshrl.u32 %v531, 7
    %v533 = vsub.s32 0, %v532
    %v534 = vrot.slane %v529, %v533
    %v536 = vmul.f32 %v526, %v534
    %v537 = vld [vmem:[#allocation9] sm:$0xff]
    %v538 = vld [vmem:[#allocation9 + $0x8] sm:$0xff]
    %v539 = vld [vmem:[#allocation9 + $0x10] sm:$0xff]
    %v540 = vld [vmem:[#allocation9 + $0x18] sm:$0xff]
    %v541 = vld [vmem:[#allocation9 + $0x20] sm:$0xff]
    %v542 = vld [vmem:[#allocation9 + $0x28] sm:$0xff]
    %v543 = vld [vmem:[#allocation9 + $0x30] sm:$0xff]
    %v544 = vld [vmem:[#allocation9 + $0x38] sm:$0xff]
    %v545 = vld [vmem:[#allocation9 + $0x40] sm:$0xff]
    %v546 = vld [vmem:[#allocation9 + $0x48] sm:$0xff]
    %v547 = vld [vmem:[#allocation9 + $0x50] sm:$0xff]
    %v548 = vld [vmem:[#allocation9 + $0x58] sm:$0xff]
    %v549 = vld [vmem:[#allocation9 + $0x60] sm:$0xff]
    %v550 = vld [vmem:[#allocation9 + $0x68] sm:$0xff]
    %v551 = vld [vmem:[#allocation9 + $0x70] sm:$0xff]
    %v552 = vld [vmem:[#allocation9 + $0x78] sm:$0xff]
    %553 = vmatprep.subr.mxu0 0.0
    %554 = vmatpush1.msra.mxu0 %v552
    %555 = vmatprep.subr.mxu0 0.0
    %556 = vmatpush1.msra.mxu0 %v551
    %557 = vmatprep.subr.mxu0 0.0
    %558 = vmatpush1.msra.mxu0 %v550
    %559 = vmatprep.subr.mxu0 0.0
    %560 = vmatpush1.msra.mxu0 %v549
    %561 = vmatprep.subr.mxu0 0.0
    %562 = vmatpush1.msra.mxu0 %v548
    %563 = vmatprep.subr.mxu0 0.0
    %564 = vmatpush1.msra.mxu0 %v547
    %565 = vmatprep.subr.mxu0 0.0
    %566 = vmatpush1.msra.mxu0 %v546
    %567 = vmatprep.subr.mxu0 0.0
    %568 = vmatpush1.msra.mxu0 %v545
    %569 = vmatprep.subr.mxu0 0.0
    %570 = vmatpush1.msra.mxu0 %v544
    %571 = vmatprep.subr.mxu0 0.0
    %572 = vmatpush1.msra.mxu0 %v543
    %573 = vmatprep.subr.mxu0 0.0
    %574 = vmatpush1.msra.mxu0 %v542
    %575 = vmatprep.subr.mxu0 0.0
    %576 = vmatpush1.msra.mxu0 %v541
    %577 = vmatprep.subr.mxu0 0.0
    %578 = vmatpush1.msra.mxu0 %v540
    %579 = vmatprep.subr.mxu0 0.0
    %580 = vmatpush1.msra.mxu0 %v539
    %581 = vmatprep.subr.mxu0 0.0
    %582 = vmatpush1.msra.mxu0 %v538
    %583 = vmatprep.subr.mxu0 0.0
    %584 = vmatpush1.msra.mxu0 %v537
    %585 = vmatprep.subr.mxu0 0.0
    %586 = vmatpush2.msra.mxu0 0.0
    %587 = vmatprep.subr.mxu0 0.0
    %588 = vmatpush2.msra.mxu0 0.0
    %589 = vmatprep.subr.mxu0 0.0
    %590 = vmatpush2.msra.mxu0 0.0
    %591 = vmatprep.subr.mxu0 0.0
    %592 = vmatpush2.msra.mxu0 0.0
    %593 = vmatprep.subr.mxu0 0.0
    %594 = vmatpush2.msra.mxu0 0.0
    %595 = vmatprep.subr.mxu0 0.0
    %596 = vmatpush2.msra.mxu0 0.0
    %597 = vmatprep.subr.mxu0 0.0
    %598 = vmatpush2.msra.mxu0 0.0
    %599 = vmatprep.subr.mxu0 0.0
    %600 = vmatpush2.msra.mxu0 0.0
    %601 = vmatprep.subr.mxu0 0.0
    %602 = vmatpush2.msra.mxu0 0.0
    %603 = vmatprep.subr.mxu0 0.0
    %604 = vmatpush2.msra.mxu0 0.0
    %605 = vmatprep.subr.mxu0 0.0
    %606 = vmatpush2.msra.mxu0 0.0
    %607 = vmatprep.subr.mxu0 0.0
    %608 = vmatpush2.msra.mxu0 0.0
    %609 = vmatprep.subr.mxu0 0.0
    %610 = vmatpush2.msra.mxu0 0.0
    %611 = vmatprep.subr.mxu0 0.0
    %612 = vmatpush2.msra.mxu0 0.0
    %613 = vmatprep.subr.mxu0 0.0
    %614 = vmatpush2.msra.mxu0 0.0
    %615 = vmatprep.subr.mxu0 0.0
    %616 = vmatpush2.msra.mxu0 0.0
    %617 = vmatprep.mubr.f32.mxu0 0.0
    %618 = vmatmul.mubr.f32.gmra.mxu0 %v536
    %v619 = vpop.f32.mrf.mxu0
    %v620 = vadd.f32 0.0, %v619
    %v621 = vpop.f32.mrf.mxu0
    %622 = vdwg.mxu0
    %v623 = vmul.f32 %v620, %v433
    %v624 = vld [vmem:[#allocation10] sm:$0xff]
    %v625 = vld [vmem:[#allocation10 + $0x8] sm:$0xff]
    %v626 = vld [vmem:[#allocation10 + $0x10] sm:$0xff]
    %v627 = vld [vmem:[#allocation10 + $0x18] sm:$0xff]
    %v628 = vld [vmem:[#allocation10 + $0x20] sm:$0xff]
    %v629 = vld [vmem:[#allocation10 + $0x28] sm:$0xff]
    %v630 = vld [vmem:[#allocation10 + $0x30] sm:$0xff]
    %v631 = vld [vmem:[#allocation10 + $0x38] sm:$0xff]
    %v632 = vld [vmem:[#allocation10 + $0x40] sm:$0xff]
    %v633 = vld [vmem:[#allocation10 + $0x48] sm:$0xff]
    %v634 = vld [vmem:[#allocation10 + $0x50] sm:$0xff]
    %v635 = vld [vmem:[#allocation10 + $0x58] sm:$0xff]
    %v636 = vld [vmem:[#allocation10 + $0x60] sm:$0xff]
    %v637 = vld [vmem:[#allocation10 + $0x68] sm:$0xff]
    %v638 = vld [vmem:[#allocation10 + $0x70] sm:$0xff]
    %v639 = vld [vmem:[#allocation10 + $0x78] sm:$0xff]
    %640 = vmatprep.subr.mxu0 0.0
    %641 = vmatpush1.msra.mxu0 %v639
    %642 = vmatprep.subr.mxu0 0.0
    %643 = vmatpush1.msra.mxu0 %v638
    %644 = vmatprep.subr.mxu0 0.0
    %645 = vmatpush1.msra.mxu0 %v637
    %646 = vmatprep.subr.mxu0 0.0
    %647 = vmatpush1.msra.mxu0 %v636
    %648 = vmatprep.subr.mxu0 0.0
    %649 = vmatpush1.msra.mxu0 %v635
    %650 = vmatprep.subr.mxu0 0.0
    %651 = vmatpush1.msra.mxu0 %v634
    %652 = vmatprep.subr.mxu0 0.0
    %653 = vmatpush1.msra.mxu0 %v633
    %654 = vmatprep.subr.mxu0 0.0
    %655 = vmatpush1.msra.mxu0 %v632
    %656 = vmatprep.subr.mxu0 0.0
    %657 = vmatpush1.msra.mxu0 %v631
    %658 = vmatprep.subr.mxu0 0.0
    %659 = vmatpush1.msra.mxu0 %v630
    %660 = vmatprep.subr.mxu0 0.0
    %661 = vmatpush1.msra.mxu0 %v629
    %662 = vmatprep.subr.mxu0 0.0
    %663 = vmatpush1.msra.mxu0 %v628
    %664 = vmatprep.subr.mxu0 0.0
    %665 = vmatpush1.msra.mxu0 %v627
    %666 = vmatprep.subr.mxu0 0.0
    %667 = vmatpush1.msra.mxu0 %v626
    %668 = vmatprep.subr.mxu0 0.0
    %669 = vmatpush1.msra.mxu0 %v625
    %670 = vmatprep.subr.mxu0 0.0
    %671 = vmatpush1.msra.mxu0 %v624
    %672 = vmatprep.subr.mxu0 0.0
    %673 = vmatpush2.msra.mxu0 0.0
    %674 = vmatprep.subr.mxu0 0.0
    %675 = vmatpush2.msra.mxu0 0.0
    %676 = vmatprep.subr.mxu0 0.0
    %677 = vmatpush2.msra.mxu0 0.0
    %678 = vmatprep.subr.mxu0 0.0
    %679 = vmatpush2.msra.mxu0 0.0
    %680 = vmatprep.subr.mxu0 0.0
    %681 = vmatpush2.msra.mxu0 0.0
    %682 = vmatprep.subr.mxu0 0.0
    %683 = vmatpush2.msra.mxu0 0.0
    %684 = vmatprep.subr.mxu0 0.0
    %685 = vmatpush2.msra.mxu0 0.0
    %686 = vmatprep.subr.mxu0 0.0
    %687 = vmatpush2.msra.mxu0 0.0
    %688 = vmatprep.subr.mxu0 0.0
    %689 = vmatpush2.msra.mxu0 0.0
    %690 = vmatprep.subr.mxu0 0.0
    %691 = vmatpush2.msra.mxu0 0.0
    %692 = vmatprep.subr.mxu0 0.0
    %693 = vmatpush2.msra.mxu0 0.0
    %694 = vmatprep.subr.mxu0 0.0
    %695 = vmatpush2.msra.mxu0 0.0
    %696 = vmatprep.subr.mxu0 0.0
    %697 = vmatpush2.msra.mxu0 0.0
    %698 = vmatprep.subr.mxu0 0.0
    %699 = vmatpush2.msra.mxu0 0.0
    %700 = vmatprep.subr.mxu0 0.0
    %701 = vmatpush2.msra.mxu0 0.0
    %702 = vmatprep.subr.mxu0 0.0
    %703 = vmatpush2.msra.mxu0 0.0
    %704 = vmatprep.mubr.f32.mxu0 0.0
    %705 = vmatmul.mubr.f32.gmra.mxu0 %v623
    %v706 = vpop.f32.mrf.mxu0
    %v707 = vadd.f32 0.0, %v706
    %v708 = vpop.f32.mrf.mxu0
    %709 = vdwg.mxu0
    %v710 = vld [vmem:[#allocation12] sm:$0xff]
    %v711 = vld [vmem:[#allocation12 + $0x8] sm:$0xff]
    %v712 = vld [vmem:[#allocation12 + $0x10] sm:$0xff]
    %v713 = vld [vmem:[#allocation12 + $0x18] sm:$0xff]
    %v714 = vld [vmem:[#allocation12 + $0x20] sm:$0xff]
    %v715 = vld [vmem:[#allocation12 + $0x28] sm:$0xff]
    %v716 = vld [vmem:[#allocation12 + $0x30] sm:$0xff]
    %v717 = vld [vmem:[#allocation12 + $0x38] sm:$0xff]
    %v718 = vld [vmem:[#allocation12 + $0x40] sm:$0xff]
    %v719 = vld [vmem:[#allocation12 + $0x48] sm:$0xff]
    %v720 = vld [vmem:[#allocation12 + $0x50] sm:$0xff]
    %v721 = vld [vmem:[#allocation12 + $0x58] sm:$0xff]
    %v722 = vld [vmem:[#allocation12 + $0x60] sm:$0xff]
    %v723 = vld [vmem:[#allocation12 + $0x68] sm:$0xff]
    %v724 = vld [vmem:[#allocation12 + $0x70] sm:$0xff]
    %v725 = vld [vmem:[#allocation12 + $0x78] sm:$0xff]
    %v726 = vld [vmem:[%s13] sm:$0x1]
    %v728 = vlaneseq
    %v729 = vshrl.u32 %v728, 7
    %v730 = vsub.s32 0, %v729
    %v731 = vrot.slane %v726, %v730
    %733 = vmatprep.subr.mxu0 0.0
    %734 = vmatpush1.msra.mxu0 %v725
    %735 = vmatprep.subr.mxu0 0.0
    %736 = vmatpush1.msra.mxu0 %v724
    %737 = vmatprep.subr.mxu0 0.0
    %738 = vmatpush1.msra.mxu0 %v723
    %739 = vmatprep.subr.mxu0 0.0
    %740 = vmatpush1.msra.mxu0 %v722
    %741 = vmatprep.subr.mxu0 0.0
    %742 = vmatpush1.msra.mxu0 %v721
    %743 = vmatprep.subr.mxu0 0.0
    %744 = vmatpush1.msra.mxu0 %v720
    %745 = vmatprep.subr.mxu0 0.0
    %746 = vmatpush1.msra.mxu0 %v719
    %747 = vmatprep.subr.mxu0 0.0
    %748 = vmatpush1.msra.mxu0 %v718
    %749 = vmatprep.subr.mxu0 0.0
    %750 = vmatpush1.msra.mxu0 %v717
    %751 = vmatprep.subr.mxu0 0.0
    %752 = vmatpush1.msra.mxu0 %v716
    %753 = vmatprep.subr.mxu0 0.0
    %754 = vmatpush1.msra.mxu0 %v715
    %755 = vmatprep.subr.mxu0 0.0
    %756 = vmatpush1.msra.mxu0 %v714
    %757 = vmatprep.subr.mxu0 0.0
    %758 = vmatpush1.msra.mxu0 %v713
    %759 = vmatprep.subr.mxu0 0.0
    %760 = vmatpush1.msra.mxu0 %v712
    %761 = vmatprep.subr.mxu0 0.0
    %762 = vmatpush1.msra.mxu0 %v711
    %763 = vmatprep.subr.mxu0 0.0
    %764 = vmatpush1.msra.mxu0 %v710
    %765 = vmatprep.subr.mxu0 0.0
    %766 = vmatpush2.msra.mxu0 0.0
    %767 = vmatprep.subr.mxu0 0.0
    %768 = vmatpush2.msra.mxu0 0.0
    %769 = vmatprep.subr.mxu0 0.0
    %770 = vmatpush2.msra.mxu0 0.0
    %771 = vmatprep.subr.mxu0 0.0
    %772 = vmatpush2.msra.mxu0 0.0
    %773 = vmatprep.subr.mxu0 0.0
    %774 = vmatpush2.msra.mxu0 0.0
    %775 = vmatprep.subr.mxu0 0.0
    %776 = vmatpush2.msra.mxu0 0.0
    %777 = vmatprep.subr.mxu0 0.0
    %778 = vmatpush2.msra.mxu0 0.0
    %779 = vmatprep.subr.mxu0 0.0
    %780 = vmatpush2.msra.mxu0 0.0
    %781 = vmatprep.subr.mxu0 0.0
    %782 = vmatpush2.msra.mxu0 0.0
    %783 = vmatprep.subr.mxu0 0.0
    %784 = vmatpush2.msra.mxu0 0.0
    %785 = vmatprep.subr.mxu0 0.0
    %786 = vmatpush2.msra.mxu0 0.0
    %787 = vmatprep.subr.mxu0 0.0
    %788 = vmatpush2.msra.mxu0 0.0
    %789 = vmatprep.subr.mxu0 0.0
    %790 = vmatpush2.msra.mxu0 0.0
    %791 = vmatprep.subr.mxu0 0.0
    %792 = vmatpush2.msra.mxu0 0.0
    %793 = vmatprep.subr.mxu0 0.0
    %794 = vmatpush2.msra.mxu0 0.0
    %795 = vmatprep.subr.mxu0 0.0
    %796 = vmatpush2.msra.mxu0 0.0
    %797 = vmatprep.mubr.f32.mxu0 0.0
    %798 = vmatmul.mubr.f32.gmra.mxu0 %v707
    %v799 = vpop.f32.mrf.mxu0
    %v800 = vadd.f32 %v731, %v799
    %v801 = vpop.f32.mrf.mxu0
    %802 = vdwg.mxu0
    %v803 = vmax.f32 %v800, 0.0
    %v804 = vld [vmem:[#allocation13] sm:$0xff]
    %v805 = vld [vmem:[#allocation13 + $0x8] sm:$0xff]
    %v806 = vld [vmem:[#allocation13 + $0x10] sm:$0xff]
    %v807 = vld [vmem:[#allocation13 + $0x18] sm:$0xff]
    %v808 = vld [vmem:[#allocation13 + $0x20] sm:$0xff]
    %v809 = vld [vmem:[#allocation13 + $0x28] sm:$0xff]
    %v810 = vld [vmem:[#allocation13 + $0x30] sm:$0xff]
    %v811 = vld [vmem:[#allocation13 + $0x38] sm:$0xff]
    %v812 = vld [vmem:[#allocation13 + $0x40] sm:$0xff]
    %v813 = vld [vmem:[#allocation13 + $0x48] sm:$0xff]
    %v814 = vld [vmem:[#allocation13 + $0x50] sm:$0xff]
    %v815 = vld [vmem:[#allocation13 + $0x58] sm:$0xff]
    %v816 = vld [vmem:[#allocation13 + $0x60] sm:$0xff]
    %v817 = vld [vmem:[#allocation13 + $0x68] sm:$0xff]
    %v818 = vld [vmem:[#allocation13 + $0x70] sm:$0xff]
    %v819 = vld [vmem:[#allocation13 + $0x78] sm:$0xff]
    %v820 = vld [vmem:[%s15] sm:$0x1]
    %v822 = vlaneseq
    %v823 = vshrl.u32 %v822, 7
    %v824 = vsub.s32 0, %v823
    %v825 = vrot.slane %v820, %v824
    %827 = vmatprep.subr.mxu0 0.0
    %828 = vmatpush1.msra.mxu0 %v819
    %829 = vmatprep.subr.mxu0 0.0
    %830 = vmatpush1.msra.mxu0 %v818
    %831 = vmatprep.subr.mxu0 0.0
    %832 = vmatpush1.msra.mxu0 %v817
    %833 = vmatprep.subr.mxu0 0.0
    %834 = vmatpush1.msra.mxu0 %v816
    %835 = vmatprep.subr.mxu0 0.0
    %836 = vmatpush1.msra.mxu0 %v815
    %837 = vmatprep.subr.mxu0 0.0
    %838 = vmatpush1.msra.mxu0 %v814
    %839 = vmatprep.subr.mxu0 0.0
    %840 = vmatpush1.msra.mxu0 %v813
    %841 = vmatprep.subr.mxu0 0.0
    %842 = vmatpush1.msra.mxu0 %v812
    %843 = vmatprep.subr.mxu0 0.0
    %844 = vmatpush1.msra.mxu0 %v811
    %845 = vmatprep.subr.mxu0 0.0
    %846 = vmatpush1.msra.mxu0 %v810
    %847 = vmatprep.subr.mxu0 0.0
    %848 = vmatpush1.msra.mxu0 %v809
    %849 = vmatprep.subr.mxu0 0.0
    %850 = vmatpush1.msra.mxu0 %v808
    %851 = vmatprep.subr.mxu0 0.0
    %852 = vmatpush1.msra.mxu0 %v807
    %853 = vmatprep.subr.mxu0 0.0
    %854 = vmatpush1.msra.mxu0 %v806
    %855 = vmatprep.subr.mxu0 0.0
    %856 = vmatpush1.msra.mxu0 %v805
    %857 = vmatprep.subr.mxu0 0.0
    %858 = vmatpush1.msra.mxu0 %v804
    %859 = vmatprep.subr.mxu0 0.0
    %860 = vmatpush2.msra.mxu0 0.0
    %861 = vmatprep.subr.mxu0 0.0
    %862 = vmatpush2.msra.mxu0 0.0
    %863 = vmatprep.subr.mxu0 0.0
    %864 = vmatpush2.msra.mxu0 0.0
    %865 = vmatprep.subr.mxu0 0.0
    %866 = vmatpush2.msra.mxu0 0.0
    %867 = vmatprep.subr.mxu0 0.0
    %868 = vmatpush2.msra.mxu0 0.0
    %869 = vmatprep.subr.mxu0 0.0
    %870 = vmatpush2.msra.mxu0 0.0
    %871 = vmatprep.subr.mxu0 0.0
    %872 = vmatpush2.msra.mxu0 0.0
    %873 = vmatprep.subr.mxu0 0.0
    %874 = vmatpush2.msra.mxu0 0.0
    %875 = vmatprep.subr.mxu0 0.0
    %876 = vmatpush2.msra.mxu0 0.0
    %877 = vmatprep.subr.mxu0 0.0
    %878 = vmatpush2.msra.mxu0 0.0
    %879 = vmatprep.subr.mxu0 0.0
    %880 = vmatpush2.msra.mxu0 0.0
    %881 = vmatprep.subr.mxu0 0.0
    %882 = vmatpush2.msra.mxu0 0.0
    %883 = vmatprep.subr.mxu0 0.0
    %884 = vmatpush2.msra.mxu0 0.0
    %885 = vmatprep.subr.mxu0 0.0
    %886 = vmatpush2.msra.mxu0 0.0
    %887 = vmatprep.subr.mxu0 0.0
    %888 = vmatpush2.msra.mxu0 0.0
    %889 = vmatprep.subr.mxu0 0.0
    %890 = vmatpush2.msra.mxu0 0.0
    %891 = vmatprep.mubr.f32.mxu0 0.0
    %892 = vmatmul.mubr.f32.gmra.mxu0 %v803
    %v893 = vpop.f32.mrf.mxu0
    %v894 = vadd.f32 %v825, %v893
    %v895 = vpop.f32.mrf.mxu0
    %896 = vdwg.mxu0
    %897 = vst [vmem:[%s16] sm:$0xff] %v894
    // Predicated region
    $region98: #{netae_forward.1} parent=1 // pred_check
      _
    $region99: #{netae_forward.1} parent=1 // pred_check_branch
      %899 = sbr.rel (0) target = $region101
    $region100: #{netae_forward.1} parent=1 // pred_region
      _
    $region101: #{netae_forward.1} parent=1 // pred_fallthru
      _
    // Predicated region
    $region102: #{netae_forward.1} parent=1 // pred_check
      _
    $region103: #{netae_forward.1} parent=1 // pred_check_branch
      %901 = sbr.rel (0) target = $region105
    $region104: #{netae_forward.1} parent=1 // pred_region
      _
    $region105: #{netae_forward.1} parent=1 // pred_fallthru
      _
    %902 = vsyncpa [#allocation3], 1
    %903 = vsyncpa [#allocation5], 1
    %904 = vsyncpa [#allocation8], 1
    %905 = vsyncpa [#allocation11], 1
    %906 = vsyncpa [#allocation14], 1

</llo_original>
